<compile_context>
chip_gen: v7x
topology: tpu7x:2x2x1
jax: 0.10.0
libtpu: 0.0.40
codegen_flags: <defaults>
</compile_context>

<pallas_src>
import functools

import numpy as np
import jax
import jax.numpy as jnp
from jax.experimental import pallas as pl
from jax.experimental.pallas import tpu as pltpu

FACTOR = 2
KERNEL_1D = (1.0, 3.0, 3.0, 1.0)  # standard blur kernel used with this module


# ----------------------------- parameter setup ------------------------------

def make_kernel(k1d):
    k = np.asarray(k1d, dtype=np.float32)
    if k.ndim == 1:
        k = np.outer(k, k)
    k = k / k.sum()
    return k


def _upsample_pads(kernel_len, factor):
    p = kernel_len - factor
    pad0 = (p + 1) // 2 + factor - 1
    pad1 = p // 2
    return pad0, pad1


@functools.lru_cache(maxsize=None)
def _upfirdn1d_matrix(kernel_key, factor, n_in):
    """Dense (n_out, n_in) matrix M with M @ x == 1-D upfirdn(x): zero-insert up
    by `factor`, zero-pad by (pad0, pad1), correlate with the flipped 1-D taps
    g = kernel * factor / sum(kernel).  The separable 2-D op is A_H @ x @ A_W^T
    (edges read zeros, exactly matching upfirdn2d's zero padding)."""
    k1 = np.asarray(kernel_key, dtype=np.float32)
    assert k1.ndim == 1, "expected a 1-D (separable) blur kernel"
    g = k1 * factor / k1.sum()           # outer(g, g) == make_kernel(k1) * factor**2
    kk = g.shape[0]
    pad0, pad1 = _upsample_pads(kk, factor)
    n_out = n_in * factor + pad0 + pad1 - kk + 1
    gflip = g[::-1]
    o = np.arange(n_out)[:, None]
    j = np.arange(n_in)[None, :]
    t = factor * j + pad0 - o
    valid = (t >= 0) & (t < kk)
    m = np.where(valid, gflip[np.clip(t, 0, kk - 1)], 0.0).astype(np.float32)
    return m


# ------------------------------- Pallas kernel ------------------------------

def _upsample_kernel(x_ref, ah_ref, awt_ref, o_ref, *scratch, flat_h):
    # x_ref:   (bnc, H, W)     input planes for this grid step (input dtype)
    # ah_ref:  (Ho, H)         vertical upsample+filter matrix (bf16, constant)
    # awt_ref: (W, Wo)         horizontal matrix, transposed (bf16, constant)
    # o_ref:   (bnc, Ho, Wo)   fully interleaved output planes
    bnc, h, w = x_ref.shape
    ah = ah_ref[...]
    awt = awt_ref[...]

    if flat_h:
        rows_ref = scratch[0]                       # (bnc, H, Wo) f32 VMEM scratch
        wo = rows_ref.shape[-1]
        # Horizontal pass: a single MXU matmul over every plane of the block.
        x2 = x_ref[...].reshape(bnc * h, w).astype(jnp.bfloat16)
        rows = jnp.dot(x2, awt, preferred_element_type=jnp.float32)   # (bnc*H, Wo)
        rows_ref[...] = rows.reshape(bnc, h, wo)

        # Vertical pass: per-plane matmul; fori_loop bounds code size / live ranges.
        def vbody(i, c):
            o_ref[i] = jnp.dot(ah, rows_ref[i].astype(jnp.bfloat16),
                               preferred_element_type=jnp.float32).astype(o_ref.dtype)
            return c
        jax.lax.fori_loop(0, bnc, vbody, 0, unroll=min(bnc, 2))
    else:
        # Fallback for H not a multiple of 8 (tiny planes): per-plane, both passes.
        def body(i, c):
            xi = x_ref[i].astype(jnp.bfloat16)                           # (H, W)
            ri = jnp.dot(xi, awt, preferred_element_type=jnp.float32)    # (H, Wo)
            o_ref[i] = jnp.dot(ah, ri.astype(jnp.bfloat16),
                               preferred_element_type=jnp.float32).astype(o_ref.dtype)
            return c
        jax.lax.fori_loop(0, bnc, body, 0, unroll=min(bnc, 2))


# --------------------------- tiling / VMEM planning --------------------------

def _vmem_capacity_bytes():
    try:
        return int(pltpu.get_tpu_info().vmem_capacity_bytes)
    except Exception:
        return 64 * 1024 * 1024          # conservative default (v7x per-TensorCore)


def _ru(x, m):
    return -(-x // m) * m


def _plan_blocks(nc, h, w, ho, wo, io_bytes):
    """Planes-per-block and vmem limit from a per-generation VMEM budget."""
    cap = _vmem_capacity_bytes()
    budget = cap // 4
    # bf16 constants, single-buffered (pl.Buffered(1)).
    const_b = (_ru(ho, 8) * _ru(h, 128) + _ru(w, 8) * _ru(wo, 128)) * 2

    def usage(b):
        in_blk = b * h * _ru(w, 128) * io_bytes          # double-buffered below
        out_blk = b * ho * _ru(wo, 128) * io_bytes
        rows = b * h * _ru(wo, 128) * 4                  # f32 scratch
        temps = b * h * _ru(wo, 128) * 4 + 2 * ho * _ru(wo, 128) * 4
        return const_b + 2 * (in_blk + out_blk) + rows + temps

    # Keep >= 4 grid steps when possible (>= 2 pipelined steps per TensorCore on
    # dual-core chips); >= 2 steps otherwise.
    if nc >= 4:
        max_b = nc // 4
    elif nc >= 2:
        max_b = nc // 2
    else:
        max_b = 1
    best = 1
    for d in range(1, nc + 1):
        if nc % d == 0 and d <= max_b and usage(d) <= budget:
            best = d
    vmem_limit = int(min(cap - (4 << 20),
                         max(32 << 20, int(usage(best) * 1.5) + (8 << 20))))
    return best, vmem_limit


# ------------------------------ cached call builder --------------------------

@functools.lru_cache(maxsize=None)
def _build_upsample_call(nc, h, w, dtype, kernel_key, factor):
    a_h = _upfirdn1d_matrix(kernel_key, factor, h)      # (Ho, H) f32
    a_w = _upfirdn1d_matrix(kernel_key, factor, w)      # (Wo, W) f32
    ho, wo = a_h.shape[0], a_w.shape[0]

    io_bytes = np.dtype(dtype).itemsize
    bnc, vmem_limit = _plan_blocks(nc, h, w, ho, wo, io_bytes)
    flat_h = (h % 8 == 0)

    # Taps stored as bf16 (exact for the standard [1,3,3,1] blur): both dots are
    # single-pass bf16 MXU matmuls with f32 accumulation.
    ah_dev = jnp.asarray(a_h, dtype=jnp.bfloat16)
    awt_dev = jnp.asarray(np.ascontiguousarray(a_w.T), dtype=jnp.bfloat16)

    scratch_shapes = (pltpu.VMEM((bnc, h, wo), jnp.float32),) if flat_h else ()

    call = pl.pallas_call(
        functools.partial(_upsample_kernel, flat_h=flat_h),
        out_shape=jax.ShapeDtypeStruct((nc, ho, wo), dtype),
        grid=(nc // bnc,),
        in_specs=[
            pl.BlockSpec((bnc, h, w), lambda i: (i, 0, 0)),
            # Constant operands: fetched once, single-buffered.
            pl.BlockSpec((ho, h), lambda i: (0, 0), pipeline_mode=pl.Buffered(1)),
            pl.BlockSpec((w, wo), lambda i: (0, 0), pipeline_mode=pl.Buffered(1)),
        ],
        out_specs=pl.BlockSpec((bnc, ho, wo), lambda i: (i, 0, 0)),
        scratch_shapes=scratch_shapes,
        compiler_params=pltpu.CompilerParams(
            dimension_semantics=("parallel",),
            vmem_limit_bytes=vmem_limit),
    )
    return call, ah_dev, awt_dev, ho, wo


def upsample(x, kernel_1d=KERNEL_1D, factor=FACTOR):
    """Equivalent of Upsample(kernel_1d, factor).forward(x) with x in NCHW."""
    n, c, h, w = x.shape
    call, ah, awt, ho, wo = _build_upsample_call(
        n * c, h, w, np.dtype(x.dtype), tuple(float(v) for v in kernel_1d), int(factor))
    out = call(x.reshape(n * c, h, w), ah, awt)
    # free reshape (leading-dim split only) -- no transpose glue
    return out.reshape(n, c, ho, wo)


# ------------------------------ pure-JAX reference --------------------------

def _upsample_ref(x, kernel_1d=KERNEL_1D, factor=FACTOR):
    k = make_kernel(kernel_1d) * (factor ** 2)
    pad0, pad1 = _upsample_pads(k.shape[0], factor)
    kj = jnp.asarray(k)
    n, c, h, w = x.shape
    u = jnp.zeros((n, c, h, factor, w, factor), x.dtype)
    u = u.at[:, :, :, 0, :, 0].set(x).reshape(n, c, h * factor, w * factor)
    v = jnp.pad(u, ((0, 0), (0, 0), (pad0, pad1), (pad0, pad1)))
    wk = jnp.flip(kj, (0, 1))
    kh, kw = k.shape
    oh = h * factor + pad0 + pad1 - kh + 1
    ow = w * factor + pad0 + pad1 - kw + 1
    out = jnp.zeros((n, c, oh, ow), jnp.float32)
    for ky in range(kh):
        for kx in range(kw):
            out = out + wk[ky, kx] * v[:, :, ky:ky + oh, kx:kx + ow]
    return out.astype(x.dtype)


# ------------------------------------ main -----------------------------------

if __name__ == "__main__":
    key = jax.random.PRNGKey(0)
    x = jax.random.normal(key, (2, 4, 16, 16), dtype=jnp.float32)

    out = jax.block_until_ready(upsample(x))
    assert out.shape == (2, 4, 32, 32), out.shape

    ref = jax.block_until_ready(_upsample_ref(x))
    # bf16 operands (f32 accumulate) per the perf review -> ~2^-9 relative error.
    np.testing.assert_allclose(np.asarray(out), np.asarray(ref),
                               rtol=2e-2, atol=2e-2)

    print("KERNEL_OK")
</pallas_src>

<mosaic_0001>
module attributes {stable_mosaic.version = 11 : i64} {
  func.func @_upsample_kernel(%arg0: i32, %arg1: memref<2x16x16xf32, #tpu.memory_space<vmem>>, %arg2: memref<32x16xbf16, #tpu.memory_space<vmem>>, %arg3: memref<16x32xbf16, #tpu.memory_space<vmem>>, %arg4: memref<2x32x32xf32, #tpu.memory_space<vmem>>, %arg5: memref<2x16x32xf32, #tpu.memory_space<vmem>>) attributes {dimension_semantics = [#tpu.dimension_semantics<parallel>], iteration_bounds = array<i64: 4>, scalar_prefetch = 0 : i64, scratch_operands = 1 : i64, tpu.core_type = #tpu.core_type<tc>, window_params = [{transform_indices = @transform_0, window_bounds = array<i64: 2, 16, 16>}, {pipeline_mode = #tpu.pipeline_mode<synchronous>, transform_indices = @transform_1, window_bounds = array<i64: 32, 16>}, {pipeline_mode = #tpu.pipeline_mode<synchronous>, transform_indices = @transform_2, window_bounds = array<i64: 16, 32>}, {transform_indices = @transform_3, window_bounds = array<i64: 2, 32, 32>}]} {
    %c0 = arith.constant 0 : index
    %c0_0 = arith.constant 0 : index
    %0 = vector.load %arg2[%c0, %c0_0] : memref<32x16xbf16, #tpu.memory_space<vmem>>, vector<32x16xbf16>
    %c0_1 = arith.constant 0 : index
    %c0_2 = arith.constant 0 : index
    %1 = vector.load %arg3[%c0_1, %c0_2] : memref<16x32xbf16, #tpu.memory_space<vmem>>, vector<16x32xbf16>
    %c0_3 = arith.constant 0 : index
    %c0_4 = arith.constant 0 : index
    %c0_5 = arith.constant 0 : index
    %2 = vector.load %arg1[%c0_3, %c0_4, %c0_5] : memref<2x16x16xf32, #tpu.memory_space<vmem>>, vector<2x16x16xf32>
    %3 = vector.shape_cast %2 : vector<2x16x16xf32> to vector<32x16xf32>
    %4 = arith.truncf %3 : vector<32x16xf32> to vector<32x16xbf16>
    %cst = arith.constant dense<0.000000e+00> : vector<32x32xf32>
    %5 = tpu.matmul %4, %1, %cst {dimension_numbers = #tpu.dot_dimension_numbers<[1], [0], [0], [1], [0, 0, 1, 1], [], []>} : vector<32x16xbf16>, vector<16x32xbf16>, vector<32x32xf32> -> vector<32x32xf32>
    %6 = vector.shape_cast %5 : vector<32x32xf32> to vector<2x16x32xf32>
    %c0_6 = arith.constant 0 : index
    %c0_7 = arith.constant 0 : index
    %c0_8 = arith.constant 0 : index
    %7 = vector.load %arg5[%c0_6, %c0_7, %c0_8] : memref<2x16x32xf32, #tpu.memory_space<vmem>>, vector<2x16x32xf32>
    tpu.vector_store %arg5[%c0_6, %c0_7, %c0_8], %6 {strides = array<i32>} : memref<2x16x32xf32, #tpu.memory_space<vmem>>, vector<2x16x32xf32>,
    %c0_i32 = arith.constant 0 : i32
    %8 = arith.index_cast %c0_i32 : i32 to index
    %c0_9 = arith.constant 0 : index
    %c0_10 = arith.constant 0 : index
    %9 = vector.load %arg5[%8, %c0_9, %c0_10] : memref<2x16x32xf32, #tpu.memory_space<vmem>>, vector<1x16x32xf32>
    %10 = vector.shape_cast %9 : vector<1x16x32xf32> to vector<16x32xf32>
    %11 = arith.truncf %10 : vector<16x32xf32> to vector<16x32xbf16>
    %cst_11 = arith.constant dense<0.000000e+00> : vector<32x32xf32>
    %12 = tpu.matmul %0, %11, %cst_11 {dimension_numbers = #tpu.dot_dimension_numbers<[1], [0], [0], [1], [0, 0, 1, 1], [], []>} : vector<32x16xbf16>, vector<16x32xbf16>, vector<32x32xf32> -> vector<32x32xf32>
    %13 = arith.index_cast %c0_i32 : i32 to index
    %c0_12 = arith.constant 0 : index
    %c0_13 = arith.constant 0 : index
    %14 = vector.load %arg4[%13, %c0_12, %c0_13] : memref<2x32x32xf32, #tpu.memory_space<vmem>>, vector<1x32x32xf32>
    %15 = vector.shape_cast %14 : vector<1x32x32xf32> to vector<32x32xf32>
    %16 = vector.shape_cast %12 : vector<32x32xf32> to vector<1x32x32xf32>
    tpu.vector_store %arg4[%13, %c0_12, %c0_13], %16 {strides = array<i32>} : memref<2x32x32xf32, #tpu.memory_space<vmem>>, vector<1x32x32xf32>,
    %c1_i32 = arith.constant 1 : i32
    %17 = arith.index_cast %c1_i32 : i32 to index
    %c0_14 = arith.constant 0 : index
    %c0_15 = arith.constant 0 : index
    %18 = vector.load %arg5[%17, %c0_14, %c0_15] : memref<2x16x32xf32, #tpu.memory_space<vmem>>, vector<1x16x32xf32>
    %19 = vector.shape_cast %18 : vector<1x16x32xf32> to vector<16x32xf32>
    %20 = arith.truncf %19 : vector<16x32xf32> to vector<16x32xbf16>
    %cst_16 = arith.constant dense<0.000000e+00> : vector<32x32xf32>
    %21 = tpu.matmul %0, %20, %cst_16 {dimension_numbers = #tpu.dot_dimension_numbers<[1], [0], [0], [1], [0, 0, 1, 1], [], []>} : vector<32x16xbf16>, vector<16x32xbf16>, vector<32x32xf32> -> vector<32x32xf32>
    %22 = arith.index_cast %c1_i32 : i32 to index
    %c0_17 = arith.constant 0 : index
    %c0_18 = arith.constant 0 : index
    %23 = vector.load %arg4[%22, %c0_17, %c0_18] : memref<2x32x32xf32, #tpu.memory_space<vmem>>, vector<1x32x32xf32>
    %24 = vector.shape_cast %23 : vector<1x32x32xf32> to vector<32x32xf32>
    %25 = vector.shape_cast %21 : vector<32x32xf32> to vector<1x32x32xf32>
    tpu.vector_store %arg4[%22, %c0_17, %c0_18], %25 {strides = array<i32>} : memref<2x32x32xf32, #tpu.memory_space<vmem>>, vector<1x32x32xf32>,
    %c2_i32 = arith.constant 2 : i32
    return
  }
  func.func @transform_0(%arg0: i32) -> (i32, i32, i32) {
    %c0_i32 = arith.constant 0 : i32
    %c0_i32_0 = arith.constant 0 : i32
    %c0_i32_1 = arith.constant 0 : i32
    return %arg0, %c0_i32, %c0_i32_0 : i32, i32, i32
  }
  func.func @transform_1(%arg0: i32) -> (i32, i32) {
    %c0_i32 = arith.constant 0 : i32
    %c0_i32_0 = arith.constant 0 : i32
    %c0_i32_1 = arith.constant 0 : i32
    return %c0_i32, %c0_i32_0 : i32, i32
  }
  func.func @transform_2(%arg0: i32) -> (i32, i32) {
    %c0_i32 = arith.constant 0 : i32
    %c0_i32_0 = arith.constant 0 : i32
    %c0_i32_1 = arith.constant 0 : i32
    return %c0_i32, %c0_i32_0 : i32, i32
  }
  func.func @transform_3(%arg0: i32) -> (i32, i32, i32) {
    %c0_i32 = arith.constant 0 : i32
    %c0_i32_0 = arith.constant 0 : i32
    %c0_i32_1 = arith.constant 0 : i32
    return %arg0, %c0_i32, %c0_i32_0 : i32, i32, i32
  }
}

</mosaic_0001>

<llo_original>
// kernel: tpu_custom_call.1
$region0: #{tpu_custom_call.1}
  #allocation0 [shape = 'u32[]', space=smem, size = 0x4, offset = 0x4, fixed_abs, tag = 'smem constant byte address 0x4 - core index']
  #allocation1 [shape = 'u32[144,128]{1,0:T(1,128)}', space=vmem, size = 0x12000, scoped, tag = 'internal scratch']
  #allocation2 [shape = 'f32[2,16,32]{2,1,0:T(8,128)}', space=vmem, size = 0x4000, scoped, tag = 'scratch operand']
  %s0 = inlined_call_operand.hbm [shape: f32[8,16,16], index: 0, kind: input, shape index: {}]
  %s1 = inlined_call_operand.vmem [shape: bf16[32,16], index: 1, kind: input, shape index: {}]
  %s2 = inlined_call_operand.vmem [shape: bf16[16,32], index: 2, kind: input, shape index: {}]
  %s3 = inlined_call_operand.hbm [shape: f32[8,32,32], index: 3, kind: output, shape index: {}]
  %s4 = sld [smem:[#allocation0]]
  $region49: #{tpu_custom_call.1} parent=0
    _
  %s6 = ssub.s32 1, %s4
  %s7 = scalar_select 0, %s6, %s4
  $region1: #{tpu_custom_call.1} parent=0
    #allocation3 [shape = 'u8[32768]{0}', space=vmem, size = 0x8000, scoped, tag = 'input window, operand 0']
    #allocation4 [shape = 's32[2]{0}', space=sflag, size = 0x8, scoped, tag = 'scoped memory for tpu_custom_call.1']
    #allocation5 [shape = 's32[2]{0}', space=sflag, size = 0x8, scoped, tag = 'scoped memory for tpu_custom_call.1']
    #allocation6 [shape = 'u8[65536]{0}', space=vmem, size = 0x10000, scoped, tag = 'output window, operand 0']
    %8 = vsyncpa [#allocation4], 0
    %s9 = scalar_lea.sflag [#allocation4], 1
    %10 = vsyncpa %s9, 0
    %11 = vsyncpa [#allocation5], 0
    %s12 = scalar_lea.sflag [#allocation5], 1
    %13 = vsyncpa %s12, 0
    loop: start=0, step=1, limit=6
    $region2: #{tpu_custom_call.1} parent=1 // loop_pre_header
      _
    $region3: #{tpu_custom_call.1} parent=1 // loop_header
      %s15 = sphi 0, %s19
      %p16 = scmp.ge.s32.totalorder %s15, 6
      %s25 = sphi 0, %s27
      %s28 = sphi 0, %s25
      %s29 = sphi 0, %s28
      %s45 = sphi 0, %s29
      %s49 = sphi 0, %s49
      %s51 = sphi 0, %s49
      %s52 = sphi 0, %s51
      %s66 = sphi 0, %s52
      %s70 = sphi 0, %s70
      %s72 = sphi 0, %s70
      %s73 = sphi 0, %s72
      %s87 = sphi 0, %s73
      %s93 = sphi 0, %s95
      %s96 = sphi 0, %s93
      %s97 = sphi 0, %s96
      %s113 = sphi 0, %s97
    $region4: #{tpu_custom_call.1} parent=1 // loop_header_branch
      %18 = sbr.rel (%p16) target = $region8
    $region5: #{tpu_custom_call.1} parent=1 // loop_body
      %s20 = ssub.s32 %s15, 1
      %s21 = ssub.s32 %s15, 2
      %s22 = sadd.s32 %s15, 1
      %s23 = ssub.s32 %s15, %s22
      %p24 = scmp.eq.s32.totalorder %s23, 0
      %s26 = sadd.s32 %s25, 1
      %s27 = scalar_select %p24, %s25, %s26
      %p30 = pneg %p24
      %p31 = scmp.eq.s32.totalorder %s15, 3
      %p32 = por %p30, %p31
      %p33 = scmp.ne.s32.totalorder %s25, %s28
      %p34 = scmp.eq.s32.totalorder %s15, 0
      %p35 = por %p33, %p34
      %p36 = scmp.ne.s32.totalorder %s25, %s28
      %p37 = scmp.eq.s32.totalorder %s20, 3
      %p38 = por %p36, %p37
      %p39 = scmp.ne.s32.totalorder %s28, %s29
      %p40 = scmp.eq.s32.totalorder %s20, 0
      %p41 = por %p39, %p40
      %p42 = scmp.ne.s32.totalorder %s28, %s29
      %p43 = scmp.eq.s32.totalorder %s21, 3
      %p44 = por %p42, %p43
      %p46 = scmp.ne.s32.totalorder %s29, %s45
      %p47 = scmp.eq.s32.totalorder %s21, 0
      %p48 = por %p46, %p47
      %s50 = sadd.s32 %s49, 1
      %p53 = scmp.eq.s32.totalorder %s15, 3
      %p54 = scmp.ne.s32.totalorder %s49, %s51
      %p55 = scmp.eq.s32.totalorder %s15, 0
      %p56 = por %p54, %p55
      %p57 = scmp.ne.s32.totalorder %s49, %s51
      %p58 = scmp.eq.s32.totalorder %s20, 3
      %p59 = por %p57, %p58
      %p60 = scmp.ne.s32.totalorder %s51, %s52
      %p61 = scmp.eq.s32.totalorder %s20, 0
      %p62 = por %p60, %p61
      %p63 = scmp.ne.s32.totalorder %s51, %s52
      %p64 = scmp.eq.s32.totalorder %s21, 3
      %p65 = por %p63, %p64
      %p67 = scmp.ne.s32.totalorder %s52, %s66
      %p68 = scmp.eq.s32.totalorder %s21, 0
      %p69 = por %p67, %p68
      %s71 = sadd.s32 %s70, 1
      %p74 = scmp.eq.s32.totalorder %s15, 3
      %p75 = scmp.ne.s32.totalorder %s70, %s72
      %p76 = scmp.eq.s32.totalorder %s15, 0
      %p77 = por %p75, %p76
      %p78 = scmp.ne.s32.totalorder %s70, %s72
      %p79 = scmp.eq.s32.totalorder %s20, 3
      %p80 = por %p78, %p79
      %p81 = scmp.ne.s32.totalorder %s72, %s73
      %p82 = scmp.eq.s32.totalorder %s20, 0
      %p83 = por %p81, %p82
      %p84 = scmp.ne.s32.totalorder %s72, %s73
      %p85 = scmp.eq.s32.totalorder %s21, 3
      %p86 = por %p84, %p85
      %p88 = scmp.ne.s32.totalorder %s73, %s87
      %p89 = scmp.eq.s32.totalorder %s21, 0
      %p90 = por %p88, %p89
      %s91 = ssub.s32 %s15, %s22
      %p92 = scmp.eq.s32.totalorder %s91, 0
      %s94 = sadd.s32 %s93, 1
      %s95 = scalar_select %p92, %s93, %s94
      %p98 = pneg %p92
      %p99 = scmp.eq.s32.totalorder %s15, 3
      %p100 = por %p98, %p99
      %p101 = scmp.ne.s32.totalorder %s93, %s96
      %p102 = scmp.eq.s32.totalorder %s15, 0
      %p103 = por %p101, %p102
      %p104 = scmp.ne.s32.totalorder %s93, %s96
      %p105 = scmp.eq.s32.totalorder %s20, 3
      %p106 = por %p104, %p105
      %p107 = scmp.ne.s32.totalorder %s96, %s97
      %p108 = scmp.eq.s32.totalorder %s20, 0
      %p109 = por %p107, %p108
      %p110 = scmp.ne.s32.totalorder %s96, %s97
      %p111 = scmp.eq.s32.totalorder %s21, 3
      %p112 = por %p110, %p111
      %p114 = scmp.ne.s32.totalorder %s97, %s113
      %p115 = scmp.eq.s32.totalorder %s21, 0
      %p116 = por %p114, %p115
      %p117 = scmp.le.s32.totalorder 1, %s15
      %p118 = scmp.lt.s32.totalorder %s15, 5
      %p119 = pnand %p117, %p118
      %p120 = pneg %p119
      // Predicated region
      $region9: #{tpu_custom_call.1} parent=5 // pred_check
        _
      $region10: #{tpu_custom_call.1} parent=5 // pred_check_branch
        %122 = sbr.rel (%p119) target = $region12
      $region11: #{tpu_custom_call.1} parent=5 // pred_region
        %s123 = ssub.s32 %s15, 1
        // Predicated region
        $region13: #{tpu_custom_call.1} parent=11 // pred_check
          %p124 = pneg %p62
        $region14: #{tpu_custom_call.1} parent=11 // pred_check_branch
          %126 = sbr.rel (%p124) target = $region16
        $region15: #{tpu_custom_call.1} parent=11 // pred_region
          _
        $region16: #{tpu_custom_call.1} parent=11 // pred_fallthru
          _
        // Predicated region
        $region17: #{tpu_custom_call.1} parent=11 // pred_check
          %p127 = pneg %p83
        $region18: #{tpu_custom_call.1} parent=11 // pred_check_branch
          %129 = sbr.rel (%p127) target = $region20
        $region19: #{tpu_custom_call.1} parent=11 // pred_region
          _
        $region20: #{tpu_custom_call.1} parent=11 // pred_fallthru
          _
      $region12: #{tpu_custom_call.1} parent=5 // pred_fallthru
        _
      %p130 = scmp.lt.s32.totalorder %s15, 4
      // Predicated region
      $region21: #{tpu_custom_call.1} parent=5 // pred_check
        %p131 = pneg %p130
      $region22: #{tpu_custom_call.1} parent=5 // pred_check_branch
        %133 = sbr.rel (%p131) target = $region24
      $region23: #{tpu_custom_call.1} parent=5 // pred_region
        // Predicated region
        $region25: #{tpu_custom_call.1} parent=23 // pred_check
          %p134 = pneg %p35
        $region26: #{tpu_custom_call.1} parent=23 // pred_check_branch
          %136 = sbr.rel (%p134) target = $region28
        $region27: #{tpu_custom_call.1} parent=23 // pred_region
          %s137 = sand.u32 %s25, 1
          %s138 = scalar_lea.sflag [#allocation4], %s137
          %s139 = sand.u32 %s25, 1
          %s140 = smul.addr %s139, 32
          %s141 = scalar_lea.vmem [#allocation3], %s140
          %s142 = smul.u32 2, %s15
          %s144 = ssub.s32 512, 512
          %145 = vsyncadd %s138, %s144
          %s146 = smul.addr %s142, 2
          %s147 = smul.addr %s146, 128
          %s148 = scalar_lea.hbm %s0, %s147
          %s149 = sshll.u32 %s141, 4
          %s150 = int_to_ptr.vmem [resolvable:$true] %s149
          %155 = dma.hbm_to_vmem [thread:$0]  %s148, 512, %s150, %s138, 128, 128, 8
        $region28: #{tpu_custom_call.1} parent=23 // pred_fallthru
          _
      $region24: #{tpu_custom_call.1} parent=5 // pred_fallthru
        _
      %p156 = scmp.le.s32.totalorder 1, %s15
      %p157 = scmp.lt.s32.totalorder %s15, 5
      %p158 = pnand %p156, %p157
      %p159 = pneg %p158
      // Predicated region
      $region29: #{tpu_custom_call.1} parent=5 // pred_check
        _
      $region30: #{tpu_custom_call.1} parent=5 // pred_check_branch
        %161 = sbr.rel (%p158) target = $region32
      $region31: #{tpu_custom_call.1} parent=5 // pred_region
        %s162 = ssub.s32 %s15, 1
        %s163 = sand.u32 %s28, 1
        %s164 = scalar_lea.sflag [#allocation4], %s163
        %s165 = sand.u32 %s28, 1
        %s166 = smul.addr %s165, 32
        %s167 = scalar_lea.vmem [#allocation3], %s166
        // Predicated region
        $region33: #{tpu_custom_call.1} parent=31 // pred_check
          %p168 = pneg %p41
        $region34: #{tpu_custom_call.1} parent=31 // pred_check_branch
          %170 = sbr.rel (%p168) target = $region36
        $region35: #{tpu_custom_call.1} parent=31 // pred_region
          %171 = dma.done %s164, 512
        $region36: #{tpu_custom_call.1} parent=31 // pred_fallthru
          _
        %s172 = sand.u32 %s28, 1
        %s173 = scalar_lea.sflag [#allocation4], %s172
        %s174 = sand.u32 %s28, 1
        %s175 = smul.addr %s174, 32
        %s176 = scalar_lea.vmem [#allocation3], %s175
        %p177 = pneg %p41
        %p178 = pneg %p38
        %p179 = pneg %p62
        %p180 = pneg %p59
        %p181 = pneg %p83
        %p182 = pneg %p80
        %p183 = pneg %p109
        %p184 = pneg %p106
        %s185 = sand.u32 %s96, 1
        %s186 = scalar_lea.sflag [#allocation5], %s185
        %s187 = sand.u32 %s96, 1
        %s188 = smul.addr %s187, 64
        %s189 = scalar_lea.vmem [#allocation6], %s188
        %s190 = smul.u32 2, %s20
        %s191 = smul.u32 2, %s20
        %v193 = vld [vmem:[%s1] sm:$0xf]
        %v194 = vld [vmem:[%s1 + $0x4] sm:$0xf]
        %v195 = vld [vmem:[%s1 + $0x8] sm:$0xf]
        %v196 = vld [vmem:[%s1 + $0xc] sm:$0xf]
        %v197 = vld [vmem:[%s2] sm:$0xf]
        %v198 = vld [vmem:[%s2 + $0x4] sm:$0xf]
        %v199 = vld [vmem:[%s167] sm:$0xff]
        %v200 = vld [vmem:[%s167 + $0x8] sm:$0xff]
        %v201 = vld [vmem:[%s167 + $0x10] sm:$0xff]
        %v202 = vld [vmem:[%s167 + $0x18] sm:$0xff]
        %v203 = vpack.c.bf16 %v200, %v199
        %v204 = vpack.c.bf16 %v202, %v201
        %v207 = vunpack.c.l.b16 %v197
        %v208 = vunpack.c.l.b16 %v198
        %v209 = vpack.c.b16 %v208, %v207
        %vm211 = vcmask 130048
        %v213 = vsel %vm211, %v203, 0
        %v216 = vsel %vm211, %v204, 0
        %218 = vmatprep.subr.bf16.mxu0 0
        %219 = vmatpush1.bf16.msra.mxu0 %v209
        %220 = vmatprep.subr.bf16.mxu0 0
        %221 = vmatpush1.bf16.msra.mxu0 0
        %222 = vmatprep.subr.bf16.mxu0 0
        %223 = vmatpush1.bf16.msra.mxu0 0
        %224 = vmatprep.subr.bf16.mxu0 0
        %225 = vmatpush1.bf16.msra.mxu0 0
        %226 = vmatprep.subr.bf16.mxu0 0
        %227 = vmatpush1.bf16.msra.mxu0 0
        %228 = vmatprep.subr.bf16.mxu0 0
        %229 = vmatpush1.bf16.msra.mxu0 0
        %230 = vmatprep.subr.bf16.mxu0 0
        %231 = vmatpush1.bf16.msra.mxu0 0
        %232 = vmatprep.subr.bf16.mxu0 0
        %233 = vmatpush1.bf16.msra.mxu0 0
        %234 = vmatprep.subr.bf16.mxu0 0
        %235 = vmatpush1.bf16.msra.mxu0 0
        %236 = vmatprep.subr.bf16.mxu0 0
        %237 = vmatpush1.bf16.msra.mxu0 0
        %238 = vmatprep.subr.bf16.mxu0 0
        %239 = vmatpush1.bf16.msra.mxu0 0
        %240 = vmatprep.subr.bf16.mxu0 0
        %241 = vmatpush1.bf16.msra.mxu0 0
        %242 = vmatprep.subr.bf16.mxu0 0
        %243 = vmatpush1.bf16.msra.mxu0 0
        %244 = vmatprep.subr.bf16.mxu0 0
        %245 = vmatpush1.bf16.msra.mxu0 0
        %246 = vmatprep.subr.bf16.mxu0 0
        %247 = vmatpush1.bf16.msra.mxu0 0
        %248 = vmatprep.subr.bf16.mxu0 0
        %249 = vmatpush1.bf16.msra.mxu0 0
        %250 = vmatprep.mubr.bf16.mxu0 0
        %251 = vmatmul.mubr.bf16.gmra.mrb[0].mxu0 %v213
        %v252 = vpop.f32.mrb[0].mxu0
        %v253 = vadd.f32 0.0, %v252
        %v254 = vpop.f32.mrb[0].mxu0
        %v255 = vpop.f32.mrb[0].mxu0
        %v256 = vadd.f32 0.0, %v255
        %v257 = vpop.f32.mrb[0].mxu0
        %258 = vmatprep.mubr.bf16.mxu0 0
        %259 = vmatmul.mubr.bf16.gmra.mrb[0].mxu0 %v216
        %v260 = vpop.f32.mrb[0].mxu0
        %v261 = vadd.f32 0.0, %v260
        %v262 = vpop.f32.mrb[0].mxu0
        %v263 = vpop.f32.mrb[0].mxu0
        %v264 = vadd.f32 0.0, %v263
        %v265 = vpop.f32.mrb[0].mxu0
        %266 = vdwg.mxu0
        %vm267 = vcmask 261120
        %268 = vst.msk [vmem:[#allocation2] sm:$0xff] %vm267, %v253
        %269 = vst.msk [vmem:[#allocation2 + $0x8] sm:$0xff] %vm267, %v256
        %270 = vst.msk [vmem:[#allocation2 + $0x10] sm:$0xff] %vm267, %v261
        %271 = vst.msk [vmem:[#allocation2 + $0x18] sm:$0xff] %vm267, %v264
        %v272 = vld [vmem:[#allocation2] sm:$0xff]
        %v273 = vld [vmem:[#allocation2 + $0x8] sm:$0xff]
        %v274 = vpack.c.bf16 %v273, %v272
        %v279 = vunpack.c.l.b16 %v193
        %v280 = vunpack.c.l.b16 %v194
        %v281 = vunpack.c.l.b16 %v195
        %v282 = vunpack.c.l.b16 %v196
        %v283 = vpack.c.b16 %v280, %v279
        %v284 = vpack.c.b16 %v282, %v281
        %v286 = vsel %vm211, %v283, 0
        %v289 = vsel %vm211, %v284, 0
        %291 = vmatprep.subr.bf16.mxu0 0
        %292 = vmatpush1.bf16.msra.mxu0 %v274
        %293 = vmatprep.subr.bf16.mxu0 0
        %294 = vmatpush1.bf16.msra.mxu0 0
        %295 = vmatprep.subr.bf16.mxu0 0
        %296 = vmatpush1.bf16.msra.mxu0 0
        %297 = vmatprep.subr.bf16.mxu0 0
        %298 = vmatpush1.bf16.msra.mxu0 0
        %299 = vmatprep.subr.bf16.mxu0 0
        %300 = vmatpush1.bf16.msra.mxu0 0
        %301 = vmatprep.subr.bf16.mxu0 0
        %302 = vmatpush1.bf16.msra.mxu0 0
        %303 = vmatprep.subr.bf16.mxu0 0
        %304 = vmatpush1.bf16.msra.mxu0 0
        %305 = vmatprep.subr.bf16.mxu0 0
        %306 = vmatpush1.bf16.msra.mxu0 0
        %307 = vmatprep.subr.bf16.mxu0 0
        %308 = vmatpush1.bf16.msra.mxu0 0
        %309 = vmatprep.subr.bf16.mxu0 0
        %310 = vmatpush1.bf16.msra.mxu0 0
        %311 = vmatprep.subr.bf16.mxu0 0
        %312 = vmatpush1.bf16.msra.mxu0 0
        %313 = vmatprep.subr.bf16.mxu0 0
        %314 = vmatpush1.bf16.msra.mxu0 0
        %315 = vmatprep.subr.bf16.mxu0 0
        %316 = vmatpush1.bf16.msra.mxu0 0
        %317 = vmatprep.subr.bf16.mxu0 0
        %318 = vmatpush1.bf16.msra.mxu0 0
        %319 = vmatprep.subr.bf16.mxu0 0
        %320 = vmatpush1.bf16.msra.mxu0 0
        %321 = vmatprep.subr.bf16.mxu0 0
        %322 = vmatpush1.bf16.msra.mxu0 0
        %323 = vmatprep.mubr.bf16.mxu0 0
        %324 = vmatmul.mubr.bf16.gmra.mrb[0].mxu0 %v286
        %v325 = vpop.f32.mrb[0].mxu0
        %v326 = vadd.f32 0.0, %v325
        %v327 = vpop.f32.mrb[0].mxu0
        %v328 = vpop.f32.mrb[0].mxu0
        %v329 = vadd.f32 0.0, %v328
        %v330 = vpop.f32.mrb[0].mxu0
        %331 = vmatprep.mubr.bf16.mxu0 0
        %332 = vmatmul.mubr.bf16.gmra.mrb[0].mxu0 %v289
        %v333 = vpop.f32.mrb[0].mxu0
        %v334 = vadd.f32 0.0, %v333
        %v335 = vpop.f32.mrb[0].mxu0
        %v336 = vpop.f32.mrb[0].mxu0
        %v337 = vadd.f32 0.0, %v336
        %v338 = vpop.f32.mrb[0].mxu0
        %339 = vdwg.mxu0
        %340 = vst.msk [vmem:[%s189] sm:$0xff] %vm267, %v326
        %341 = vst.msk [vmem:[%s189 + $0x8] sm:$0xff] %vm267, %v329
        %342 = vst.msk [vmem:[%s189 + $0x10] sm:$0xff] %vm267, %v334
        %343 = vst.msk [vmem:[%s189 + $0x18] sm:$0xff] %vm267, %v337
        %s344 = scalar_lea.vmem [#allocation2], 16
        %v345 = vld [vmem:[%s344] sm:$0xff]
        %v346 = vld [vmem:[%s344 + $0x8] sm:$0xff]
        %v347 = vpack.c.bf16 %v346, %v345
        %348 = vmatprep.subr.bf16.mxu0 0
        %349 = vmatpush1.bf16.msra.mxu0 %v347
        %350 = vmatprep.subr.bf16.mxu0 0
        %351 = vmatpush1.bf16.msra.mxu0 0
        %352 = vmatprep.subr.bf16.mxu0 0
        %353 = vmatpush1.bf16.msra.mxu0 0
        %354 = vmatprep.subr.bf16.mxu0 0
        %355 = vmatpush1.bf16.msra.mxu0 0
        %356 = vmatprep.subr.bf16.mxu0 0
        %357 = vmatpush1.bf16.msra.mxu0 0
        %358 = vmatprep.subr.bf16.mxu0 0
        %359 = vmatpush1.bf16.msra.mxu0 0
        %360 = vmatprep.subr.bf16.mxu0 0
        %361 = vmatpush1.bf16.msra.mxu0 0
        %362 = vmatprep.subr.bf16.mxu0 0
        %363 = vmatpush1.bf16.msra.mxu0 0
        %364 = vmatprep.subr.bf16.mxu0 0
        %365 = vmatpush1.bf16.msra.mxu0 0
        %366 = vmatprep.subr.bf16.mxu0 0
        %367 = vmatpush1.bf16.msra.mxu0 0
        %368 = vmatprep.subr.bf16.mxu0 0
        %369 = vmatpush1.bf16.msra.mxu0 0
        %370 = vmatprep.subr.bf16.mxu0 0
        %371 = vmatpush1.bf16.msra.mxu0 0
        %372 = vmatprep.subr.bf16.mxu0 0
        %373 = vmatpush1.bf16.msra.mxu0 0
        %374 = vmatprep.subr.bf16.mxu0 0
        %375 = vmatpush1.bf16.msra.mxu0 0
        %376 = vmatprep.subr.bf16.mxu0 0
        %377 = vmatpush1.bf16.msra.mxu0 0
        %378 = vmatprep.subr.bf16.mxu0 0
        %379 = vmatpush1.bf16.msra.mxu0 0
        %380 = vmatprep.mubr.bf16.mxu0 0
        %381 = vmatmul.mubr.bf16.gmra.mrb[0].mxu0 %v286
        %v382 = vpop.f32.mrb[0].mxu0
        %v383 = vadd.f32 0.0, %v382
        %v384 = vpop.f32.mrb[0].mxu0
        %v385 = vpop.f32.mrb[0].mxu0
        %v386 = vadd.f32 0.0, %v385
        %v387 = vpop.f32.mrb[0].mxu0
        %388 = vmatprep.mubr.bf16.mxu0 0
        %389 = vmatmul.mubr.bf16.gmra.mrb[0].mxu0 %v289
        %v390 = vpop.f32.mrb[0].mxu0
        %v391 = vadd.f32 0.0, %v390
        %v392 = vpop.f32.mrb[0].mxu0
        %v393 = vpop.f32.mrb[0].mxu0
        %v394 = vadd.f32 0.0, %v393
        %v395 = vpop.f32.mrb[0].mxu0
        %396 = vdwg.mxu0
        %s397 = scalar_lea.vmem %s189, 32 [#allocation6]
        %398 = vst.msk [vmem:[%s397] sm:$0xff] %vm267, %v383
        %399 = vst.msk [vmem:[%s397 + $0x8] sm:$0xff] %vm267, %v386
        %400 = vst.msk [vmem:[%s397 + $0x10] sm:$0xff] %vm267, %v391
        %401 = vst.msk [vmem:[%s397 + $0x18] sm:$0xff] %vm267, %v394
        %s402 = sand.u32 %s96, 1
        %s403 = scalar_lea.sflag [#allocation5], %s402
        %s404 = sand.u32 %s96, 1
        %s405 = smul.addr %s404, 64
        %s406 = scalar_lea.vmem [#allocation6], %s405
        // Predicated region
        $region37: #{tpu_custom_call.1} parent=31 // pred_check
          %p407 = pneg %p106
        $region38: #{tpu_custom_call.1} parent=31 // pred_check_branch
          %409 = sbr.rel (%p407) target = $region40
        $region39: #{tpu_custom_call.1} parent=31 // pred_region
          %s410 = smul.u32 2, %s20
          %s412 = ssub.s32 1024, 1024
          %413 = vsyncadd %s403, %s412
          %s414 = smul.addr %s410, 4
          %s415 = smul.addr %s414, 128
          %s416 = scalar_lea.hbm %s3, %s415
          %s417 = sshll.u32 %s406, 4
          %s418 = int_to_ptr.vmem [resolvable:$true] %s417
          %423 = dma.vmem_to_hbm [thread:$0]  %s418, 1024, %s416, %s403, 128, 128, 8
        $region40: #{tpu_custom_call.1} parent=31 // pred_fallthru
          _
      $region32: #{tpu_custom_call.1} parent=5 // pred_fallthru
        _
      %p424 = scmp.le.s32.totalorder 2, %s15
      // Predicated region
      $region41: #{tpu_custom_call.1} parent=5 // pred_check
        %p425 = pneg %p424
      $region42: #{tpu_custom_call.1} parent=5 // pred_check_branch
        %427 = sbr.rel (%p425) target = $region44
      $region43: #{tpu_custom_call.1} parent=5 // pred_region
        %s428 = ssub.s32 %s15, 2
        // Predicated region
        $region45: #{tpu_custom_call.1} parent=43 // pred_check
          %p429 = pneg %p112
        $region46: #{tpu_custom_call.1} parent=43 // pred_check_branch
          %431 = sbr.rel (%p429) target = $region48
        $region47: #{tpu_custom_call.1} parent=43 // pred_region
          %s432 = sand.u32 %s97, 1
          %s433 = scalar_lea.sflag [#allocation5], %s432
          %s434 = sand.u32 %s97, 1
          %s435 = smul.addr %s434, 64
          %s436 = scalar_lea.vmem [#allocation6], %s435
          %437 = dma.done %s433, 1024
        $region48: #{tpu_custom_call.1} parent=43 // pred_fallthru
          _
      $region44: #{tpu_custom_call.1} parent=5 // pred_fallthru
        _
    $region6: #{tpu_custom_call.1} parent=1 // loop_footer
      %s19 = sadd.s32 1, %s15
    $region7: #{tpu_custom_call.1} parent=1 // loop_footer_branch
      %14 = sbr.rel target = $region3
    $region8: #{tpu_custom_call.1} parent=1 // loop_exit
      _
    %438 = vsyncpa [#allocation4], 1
    %s439 = scalar_lea.sflag [#allocation4], 1
    %440 = vsyncpa %s439, 1
    %441 = vsyncpa [#allocation5], 1
    %s442 = scalar_lea.sflag [#allocation5], 1
    %443 = vsyncpa %s442, 1

</llo_original>
